<compile_context>
chip_gen: v7x
topology: tpu7x:2x2x1
jax: 0.10.0
libtpu: 0.0.40
codegen_flags: <defaults>
</compile_context>

<pallas_src>
import functools

import jax
import jax.numpy as jnp
from jax.experimental import pallas as pl
from jax.experimental.pallas import tpu as pltpu


_STREAM_THRESHOLD_BYTES = 8 * 1024 * 1024  # per-batch-element f32 slab limit


def _round_up(x: int, m: int) -> int:
    return ((x + m - 1) // m) * m


def _budgets():
    """(target_tile_bytes, vmem_limit_bytes) sized per TPU generation."""
    vmem_cap = 0
    try:
        info = pltpu.get_tpu_info()
        vmem_cap = int(getattr(info, "vmem_capacity_bytes", 0) or 0)
    except Exception:
        vmem_cap = 0
    if vmem_cap >= 100 * 1024 * 1024:          # v5e / v6e (128 MiB VMEM)
        return 12 * 1024 * 1024, 80 * 1024 * 1024
    # v7x (64 MiB per-TC VMEM) or unknown -> conservative, safe everywhere.
    return 8 * 1024 * 1024, 44 * 1024 * 1024


# ---------------------------------------------------------------------------
# Main path: TB batch elements per grid step, full (V, D) slab resident.
# ---------------------------------------------------------------------------
def _svl_batch_kernel(z_ref, o_ref, *, v_true):
    z = z_ref[...]                                    # (TB, V, D)
    if z.dtype != jnp.float32:
        z = z.astype(jnp.float32)
    # Center by the first view (shift-invariant, guards f32 cancellation).
    zc = z - z[:, 0:1, :]                             # (TB, V, D)
    sum_v = jnp.sum(zc, axis=1)                       # (TB, D)   sublane reduce
    sum_sq = jnp.sum(jnp.sum(zc * zc, axis=2), axis=1, keepdims=True)   # (TB, 1)
    corr = jnp.sum(sum_v * sum_v, axis=1, keepdims=True) * (1.0 / float(v_true))
    o_ref[...] = sum_sq - corr                        # (TB, 1)


# ---------------------------------------------------------------------------
# Fallback: stream over V chunks (one batch element per step on axis 0).
# ---------------------------------------------------------------------------
def _svl_stream_kernel(z_ref, o_ref, shift_ref, sumz_ref, sumsq_ref, *,
                       v_true, tv):
    kv = pl.program_id(1)

    @pl.when(kv == 0)
    def _init():
        z0 = z_ref[...]
        if z0.dtype != jnp.float32:
            z0 = z0.astype(jnp.float32)
        shift_ref[...] = z0[:, 0:1, :]                # first view of this elem
        sumz_ref[...] = jnp.zeros_like(sumz_ref)
        sumsq_ref[...] = jnp.zeros_like(sumsq_ref)

    z = z_ref[...]                                    # (1, tv, D)
    if z.dtype != jnp.float32:
        z = z.astype(jnp.float32)
    zc = z - shift_ref[...]                           # center by first view
    if v_true % tv != 0:
        # Ragged tail chunk: zero out out-of-range view rows (no wrapper pad).
        vids = jax.lax.broadcasted_iota(jnp.int32, zc.shape, 1) + kv * tv
        zc = jnp.where(vids < v_true, zc, 0.0)
    sumz_ref[...] += jnp.sum(zc, axis=1)              # (1, D) sublane reduce
    sumsq_ref[...] += jnp.sum(zc * zc, axis=1)        # (1, D) sublane reduce

    @pl.when(kv == pl.num_programs(1) - 1)
    def _finalize():
        s = sumz_ref[...]
        o_ref[...] = (jnp.sum(sumsq_ref[...], axis=1, keepdims=True)
                      - jnp.sum(s * s, axis=1, keepdims=True)
                      * (1.0 / float(v_true)))


def spectrum_view_loss(z, keep_batch: bool = False, lmbda: float = 0.0051, *,
                       max_tile_bytes: int | None = None,
                       _force_stream: bool = False):
    """Pallas implementation of SpectrumViewLoss.forward.

    z: (B, V, D). Returns (B,) if keep_batch else scalar.
    (lmbda is an unused module attribute in the reference forward; kept for parity.)
    max_tile_bytes / _force_stream are tuning/testing knobs only.
    """
    B, V, D = z.shape
    in_itemsize = jnp.dtype(z.dtype).itemsize
    sub_in = max(8, 32 // max(1, in_itemsize))        # sublane packing of input dtype
    d_lane = _round_up(D, 128)
    per_elem_in = _round_up(V, sub_in) * d_lane * in_itemsize   # input tile bytes / elem
    per_elem_f32 = _round_up(V, 8) * d_lane * 4                 # f32 temp bytes / elem

    target_tile, vmem_limit = _budgets()
    if max_tile_bytes is not None:
        target_tile = int(max_tile_bytes)
    vmem_headroom = vmem_limit - (2 << 20)

    use_stream = _force_stream or (per_elem_f32 > _STREAM_THRESHOLD_BYTES)

    if not use_stream:
        # --- blocked-batch path ---
        tb = max(1, target_tile // per_elem_in)                       # DMA target
        fit = max(1, vmem_headroom // (2 * per_elem_in + 2 * per_elem_f32))
        tb = min(tb, fit, B)
        if B >= 4:
            tb = min(tb, B // 4)        # >= 4 grid steps (>= 2 per TC on v7x)
        # Mosaic-friendly out-block second-minor dim: 1, a multiple of 8, or B.
        if tb >= 8:
            tb = (tb // 8) * 8
        elif tb != B:
            tb = 1
        grid_b = pl.cdiv(B, tb)         # ragged last block: OOB rows -> dropped writes

        per_batch = pl.pallas_call(
            functools.partial(_svl_batch_kernel, v_true=V),
            out_shape=jax.ShapeDtypeStruct((B, 1), jnp.float32),
            grid_spec=pltpu.PrefetchScalarGridSpec(
                num_scalar_prefetch=0,
                grid=(grid_b,),
                in_specs=[pl.BlockSpec((tb, V, D), lambda b: (b, 0, 0))],
                out_specs=pl.BlockSpec((tb, 1), lambda b: (b, 0)),
            ),
            compiler_params=pltpu.CompilerParams(
                dimension_semantics=("parallel",),
                vmem_limit_bytes=vmem_limit,
            ),
        )(z)
    else:
        # --- streamed-V path (huge per-batch slabs) ---
        tv = max(sub_in,
                 ((target_tile // (d_lane * in_itemsize)) // sub_in) * sub_in)
        fit_tv = max(sub_in,
                     ((vmem_headroom // (d_lane * (2 * in_itemsize + 8)))
                      // sub_in) * sub_in)
        tv = min(tv, fit_tv, _round_up(V, sub_in))
        grid_kv = pl.cdiv(V, tv)        # ragged last chunk masked in-kernel

        per_batch = pl.pallas_call(
            functools.partial(_svl_stream_kernel, v_true=V, tv=tv),
            out_shape=jax.ShapeDtypeStruct((B, 1), jnp.float32),
            grid_spec=pltpu.PrefetchScalarGridSpec(
                num_scalar_prefetch=0,
                grid=(B, grid_kv),
                in_specs=[pl.BlockSpec((1, tv, D), lambda b, v: (b, v, 0))],
                out_specs=pl.BlockSpec((1, 1), lambda b, v: (b, 0)),
                scratch_shapes=[
                    pltpu.VMEM((1, 1, D), jnp.float32),   # first-view shift
                    pltpu.VMEM((1, D), jnp.float32),      # sum_v zc   per d
                    pltpu.VMEM((1, D), jnp.float32),      # sum zc^2   per d
                ],
            ),
            compiler_params=pltpu.CompilerParams(
                dimension_semantics=("parallel", "arbitrary"),
                vmem_limit_bytes=vmem_limit,
            ),
        )(z)

    per_batch = per_batch[:, 0]                        # (B,)
    if keep_batch:
        return per_batch
    return jnp.sum(per_batch)


def _reference(z, keep_batch=False):
    z = z.astype(jnp.float32)
    mean = jnp.mean(z, axis=1, keepdims=True)
    dist = (z - mean) ** 2
    if keep_batch:
        return jnp.sum(dist, axis=(1, 2))
    return jnp.sum(dist)


if __name__ == "__main__":
    key = jax.random.PRNGKey(0)
    k1, k2, k3, k4 = jax.random.split(key, 4)

    # Case 1: small shape -> single full-array tile (tb == B, grid == 1).
    z1 = jax.random.normal(k1, (2, 8, 32), dtype=jnp.float32)
    o1s = jax.block_until_ready(spectrum_view_loss(z1, keep_batch=False))
    o1b = jax.block_until_ready(spectrum_view_loss(z1, keep_batch=True))
    assert jnp.allclose(o1s, _reference(z1, False), rtol=1e-5, atol=1e-5)
    assert jnp.allclose(o1b, _reference(z1, True), rtol=1e-5, atol=1e-5)

    # Case 2: larger batch -> multiple batch elements per grid step (tb = 16, grid = 4).
    z2 = jax.random.normal(k2, (64, 8, 32), dtype=jnp.float32) + 3.0  # nonzero mean
    o2s = jax.block_until_ready(spectrum_view_loss(z2, keep_batch=False))
    o2b = jax.block_until_ready(spectrum_view_loss(z2, keep_batch=True))
    assert jnp.allclose(o2s, _reference(z2, False), rtol=1e-4, atol=1e-3)
    assert jnp.allclose(o2b, _reference(z2, True), rtol=1e-4, atol=1e-4)

    # Case 3: bf16 input + ragged last batch block (B=44, tb=8 -> grid=6, no pad).
    z3 = jax.random.normal(k3, (44, 8, 32), dtype=jnp.bfloat16)
    o3s = jax.block_until_ready(spectrum_view_loss(z3, keep_batch=False))
    o3b = jax.block_until_ready(spectrum_view_loss(z3, keep_batch=True))
    assert jnp.allclose(o3s, _reference(z3, False), rtol=1e-4, atol=1e-3)
    assert jnp.allclose(o3b, _reference(z3, True), rtol=1e-4, atol=1e-4)

    # Case 4: force the streamed-V fallback with a tiny chunk (tv=8, 3 chunks,
    # ragged masked tail, per-batch accumulators across kv steps).
    z4 = jax.random.normal(k4, (3, 20, 32), dtype=jnp.float32) + 2.0
    o4s = jax.block_until_ready(spectrum_view_loss(
        z4, keep_batch=False, max_tile_bytes=8 * 128 * 4, _force_stream=True))
    o4b = jax.block_until_ready(spectrum_view_loss(
        z4, keep_batch=True, max_tile_bytes=8 * 128 * 4, _force_stream=True))
    assert jnp.allclose(o4s, _reference(z4, False), rtol=1e-4, atol=1e-3)
    assert jnp.allclose(o4b, _reference(z4, True), rtol=1e-4, atol=1e-3)

    print("KERNEL_OK")
</pallas_src>

<mosaic_0001>
module attributes {stable_mosaic.version = 11 : i64} {
  func.func @_svl_batch_kernel(%arg0: i32, %arg1: memref<2x8x32xf32, #tpu.memory_space<vmem>>, %arg2: memref<2x1xf32, #tpu.memory_space<vmem>>) attributes {dimension_semantics = [#tpu.dimension_semantics<parallel>], iteration_bounds = array<i64: 1>, scalar_prefetch = 0 : i64, scratch_operands = 0 : i64, tpu.core_type = #tpu.core_type<tc>, window_params = [{transform_indices = @transform_0, window_bounds = array<i64: 2, 8, 32>}, {transform_indices = @transform_1, window_bounds = array<i64: 2, 1>}]} {
    %c0 = arith.constant 0 : index
    %c0_0 = arith.constant 0 : index
    %c0_1 = arith.constant 0 : index
    %0 = vector.load %arg1[%c0, %c0_0, %c0_1] : memref<2x8x32xf32, #tpu.memory_space<vmem>>, vector<2x8x32xf32>
    %1 = vector.extract_strided_slice %0 {offsets = [0, 0, 0], sizes = [2, 1, 32], strides = [1, 1, 1]} : vector<2x8x32xf32> to vector<2x1x32xf32>
    %2 = vector.broadcast %1 : vector<2x1x32xf32> to vector<2x8x32xf32>
    %3 = arith.subf %0, %2 : vector<2x8x32xf32>
    %cst = arith.constant dense<0.000000e+00> : vector<2x32xf32>
    %4 = vector.multi_reduction <add>, %3, %cst [1] : vector<2x8x32xf32> to vector<2x32xf32>
    %5 = arith.mulf %3, %3 : vector<2x8x32xf32>
    %cst_2 = arith.constant dense<0.000000e+00> : vector<2x8xf32>
    %6 = vector.multi_reduction <add>, %5, %cst_2 [2] : vector<2x8x32xf32> to vector<2x8xf32>
    %cst_3 = arith.constant dense<0.000000e+00> : vector<2xf32>
    %7 = vector.multi_reduction <add>, %6, %cst_3 [1] : vector<2x8xf32> to vector<2xf32>
    %8 = vector.shape_cast %7 : vector<2xf32> to vector<2x1xf32>
    %9 = arith.mulf %4, %4 : vector<2x32xf32>
    %cst_4 = arith.constant dense<0.000000e+00> : vector<2xf32>
    %10 = vector.multi_reduction <add>, %9, %cst_4 [1] : vector<2x32xf32> to vector<2xf32>
    %11 = vector.shape_cast %10 : vector<2xf32> to vector<2x1xf32>
    %cst_5 = arith.constant 1.250000e-01 : f32
    %12 = vector.broadcast %cst_5 : f32 to vector<2x1xf32>
    %13 = arith.mulf %11, %12 : vector<2x1xf32>
    %14 = arith.subf %8, %13 : vector<2x1xf32>
    %c0_6 = arith.constant 0 : index
    %c0_7 = arith.constant 0 : index
    %15 = vector.load %arg2[%c0_6, %c0_7] : memref<2x1xf32, #tpu.memory_space<vmem>>, vector<2x1xf32>
    tpu.vector_store %arg2[%c0_6, %c0_7], %14 {strides = array<i32>} : memref<2x1xf32, #tpu.memory_space<vmem>>, vector<2x1xf32>,
    return
  }
  func.func @transform_0(%arg0: i32) -> (i32, i32, i32) {
    %c0_i32 = arith.constant 0 : i32
    %c0_i32_0 = arith.constant 0 : i32
    %c0_i32_1 = arith.constant 0 : i32
    return %arg0, %c0_i32, %c0_i32_0 : i32, i32, i32
  }
  func.func @transform_1(%arg0: i32) -> (i32, i32) {
    %c0_i32 = arith.constant 0 : i32
    %c0_i32_0 = arith.constant 0 : i32
    return %arg0, %c0_i32 : i32, i32
  }
}

</mosaic_0001>

<llo_original>
// kernel: tpu_custom_call.1
$region0: #{tpu_custom_call.1}
  #allocation0 [shape = 'u32[]', space=smem, size = 0x4, offset = 0x4, fixed_abs, tag = 'smem constant byte address 0x4 - core index']
  #allocation1 [shape = 'u32[144,128]{1,0:T(1,128)}', space=vmem, size = 0x12000, scoped, tag = 'internal scratch']
  %s0 = inlined_call_operand.hbm [shape: f32[2,8,32], index: 0, kind: input, shape index: {}]
  %s1 = inlined_call_operand.vmem [shape: f32[2,1], index: 1, kind: output, shape index: {}]
  %s2 = sld [smem:[#allocation0]]
  $region18: #{tpu_custom_call.1} parent=0
    _
  %s4 = ssub.s32 1, %s2
  %s5 = scalar_select 0, %s4, %s2
  $region1: #{tpu_custom_call.1} parent=0
    #allocation2 [shape = 'u8[8192]{0}', space=vmem, size = 0x2000, scoped, tag = 'input window, operand 0, single buffered']
    #allocation3 [shape = 's32[1]{0}', space=sflag, size = 0x4, scoped, tag = 'scoped memory for tpu_custom_call.1']
    %6 = vsyncpa [#allocation3], 0
    // Predicated region
    $region2: #{tpu_custom_call.1} parent=1 // pred_check
      _
    $region3: #{tpu_custom_call.1} parent=1 // pred_check_branch
      %8 = sbr.rel (0) target = $region5
    $region4: #{tpu_custom_call.1} parent=1 // pred_region
      %s10 = ssub.s32 256, 256
      %11 = vsyncadd [#allocation3], %s10
      %s12 = sshll.u32 [#allocation2], 4
      %s13 = int_to_ptr.vmem [resolvable:$true] %s12
      %18 = dma.hbm_to_vmem [thread:$0]  %s0, 256, %s13, [#allocation3], 128, 128, 8
    $region5: #{tpu_custom_call.1} parent=1 // pred_fallthru
      _
    // Predicated region
    $region6: #{tpu_custom_call.1} parent=1 // pred_check
      _
    $region7: #{tpu_custom_call.1} parent=1 // pred_check_branch
      %20 = sbr.rel (0) target = $region9
    $region8: #{tpu_custom_call.1} parent=1 // pred_region
      %21 = dma.done [#allocation3], 256
    $region9: #{tpu_custom_call.1} parent=1 // pred_fallthru
      _
    %v22 = vld [vmem:[#allocation2] sm:$0xff]
    %v23 = vld [vmem:[#allocation2 + $0x8] sm:$0xff]
    %v24 = vlaneseq
    %v25 = vshrl.u32 %v24, 7
    %v26 = vsub.s32 0, %v25
    %v27 = vrot.slane %v22, %v26
    %v28 = vlaneseq
    %v29 = vshrl.u32 %v28, 7
    %v30 = vsub.s32 0, %v29
    %v31 = vrot.slane %v23, %v30
    %v32 = vsub.f32 %v22, %v27
    %v33 = vsub.f32 %v23, %v31
    %vm34 = vcmask 261120
    %v35 = vsel %vm34, %v32, 0.0
    %v36 = vrot.slane %v35, 4
    %v37 = vadd.f32 %v35, %v36
    %v38 = vrot.slane %v37, 2
    %v39 = vadd.f32 %v37, %v38
    %v40 = vrot.slane %v39, 1
    %v41 = vadd.f32 %v39, %v40
    %v42 = vsel %vm34, %v33, 0.0
    %v43 = vrot.slane %v42, 4
    %v44 = vadd.f32 %v42, %v43
    %v45 = vrot.slane %v44, 2
    %v46 = vadd.f32 %v44, %v45
    %v47 = vrot.slane %v46, 1
    %v48 = vadd.f32 %v46, %v47
    %v49 = vmul.f32 %v32, %v32
    %v50 = vmul.f32 %v33, %v33
    %v51 = vsel %vm34, %v49, 0.0
    %52 = vadd.xlane.f32.xlu0 %v51
    %v53 = vpop.xlane.xlu0 %52
    %v54 = vsel %vm34, %v50, 0.0
    %55 = vadd.xlane.f32.xlu0 %v54
    %v56 = vpop.xlane.xlu0 %55
    %v59 = vlaneseq
    %v60 = vand.u32 %v59, 127
    %v61 = vlaneseq
    %v62 = vshrl.u32 %v61, 7
    %v63 = vsub.s32 %v60, %v62
    %v64 = vrot.slane %v53, %v63
    %v65 = vlaneseq
    %v66 = vshrl.u32 %v65, 7
    %v67 = vsub.s32 %v60, %v66
    %v68 = vrot.slane %v56, %v67
    %vm69 = vcmask 1041409
    %v70 = vsel %vm69, %v68, %v64
    %vm72 = vcmask 58368
    %v73 = vsel %vm72, %v70, 0.0
    %74 = vadd.xlane.f32.xlu0 %v73
    %v75 = vpop.xlane.xlu0 %74
    %v76 = vmul.f32 %v41, %v41
    %v77 = vmul.f32 %v48, %v48
    %v80 = vsel %vm69, %v77, %v76
    %vm82 = vcmask 254976
    %v83 = vsel %vm82, %v80, 0.0
    %84 = vadd.xlane.f32.xlu0 %v83
    %v85 = vpop.xlane.xlu0 %84
    %v86 = vmul.f32 %v85, 0.125
    %v87 = vsub.f32 %v75, %v86
    %vm88 = vcmask 1024
    %89 = vst.msk [vmem:[%s1] sm:$0x3] %vm88, %v87
    // Predicated region
    $region10: #{tpu_custom_call.1} parent=1 // pred_check
      _
    $region11: #{tpu_custom_call.1} parent=1 // pred_check_branch
      %91 = sbr.rel (0) target = $region13
    $region12: #{tpu_custom_call.1} parent=1 // pred_region
      _
    $region13: #{tpu_custom_call.1} parent=1 // pred_fallthru
      _
    // Predicated region
    $region14: #{tpu_custom_call.1} parent=1 // pred_check
      _
    $region15: #{tpu_custom_call.1} parent=1 // pred_check_branch
      %93 = sbr.rel (0) target = $region17
    $region16: #{tpu_custom_call.1} parent=1 // pred_region
      _
    $region17: #{tpu_custom_call.1} parent=1 // pred_fallthru
      _
    %94 = vsyncpa [#allocation3], 1

</llo_original>
